<compile_context>
chip_gen: v6e
topology: v6e:2x2x1
jax: 0.10.0
libtpu: 0.0.40
codegen_flags: <defaults>
</compile_context>

<pallas_src>
import jax
import jax.numpy as jnp
from jax.experimental import pallas as pl
from jax.experimental.pallas import tpu as pltpu

EPS = 1e-8


def _round_up(x, m):
    return -(-x // m) * m


def fused_band_kernel(mean_ref, rstd_ref, x_ref,
                      w1_ref, b1_ref, w2m_ref, b2m_ref, w2r_ref, b2r_ref,
                      om_ref, or_ref):
    """One (band, batch, time-tile) grid cell; both branches fused.

    mean/rstd : (K*B,) f32 scalar-prefetch (SMEM), GroupNorm stats
    x         : (1, 1, tT, C)  bf16 activation tile, channels on lanes
    w1        : (1, C, 2H)     bf16, [mask | residual] conv1, GN affine folded
    b1        : (1, 1, 2H)     f32
    w2m/w2r   : (1, H, 2P)     bf16, [value | gate] halves per branch (padded)
    b2m/b2r   : (1, 1, 2P)     f32
    om/or     : (1, 1, tT, P)  bf16 GLU outputs, lane-dense
    """
    H = w1_ref.shape[-1] // 2
    P = w2m_ref.shape[-1] // 2

    idx = pl.program_id(0) * pl.num_programs(1) + pl.program_id(1)
    mean = mean_ref[idx]
    rstd = rstd_ref[idx]

    x = x_ref[0, 0].astype(jnp.float32)                       # (tT, C)
    xn = ((x - mean) * rstd).astype(jnp.bfloat16)

    # Branch-fused first matmul: N = 2H.
    pre = (jnp.dot(xn, w1_ref[0], preferred_element_type=jnp.float32)
           + b1_ref[0])                                        # (tT, 2H) f32
    # bf16 tanh -> bf16 EUP path on v6e/v7x, result feeds the MXU directly.
    h = jnp.tanh(pre.astype(jnp.bfloat16))                     # (tT, 2H) bf16

    # One a/g-fused second matmul per branch: (tT, H) @ (H, 2P).
    ag_m = (jnp.dot(h[:, :H], w2m_ref[0], preferred_element_type=jnp.float32)
            + b2m_ref[0])                                      # (tT, 2P)
    ag_r = (jnp.dot(h[:, H:], w2r_ref[0], preferred_element_type=jnp.float32)
            + b2r_ref[0])                                      # (tT, 2P)

    om_ref[0, 0] = (ag_m[:, :P] * jax.nn.sigmoid(ag_m[:, P:])).astype(om_ref.dtype)
    or_ref[0, 0] = (ag_r[:, :P] * jax.nn.sigmoid(ag_r[:, P:])).astype(or_ref.dtype)


class MaskDecoderPallas:
    """JAX/Pallas port of espnet2 BSRNN MaskDecoder (norm_type='GN')."""

    def __init__(self, freq_dim, subbands, channels=128, num_spk=1,
                 key=None, t_tile=1024):
        assert freq_dim == sum(subbands), (freq_dim, subbands)
        self.freq_dim = freq_dim
        self.subbands = tuple(int(s) for s in subbands)
        self.channels = channels
        self.num_spk = num_spk
        self.t_tile = t_tile
        self.hidden = 4 * channels

        if key is None:
            key = jax.random.PRNGKey(0)

        C, H = channels, self.hidden

        def make_band_params(k, subband):
            OC = int(subband * 4 * num_spk)
            k1, k2, k3, k4, k5, k6 = jax.random.split(k, 6)
            gnw = 1.0 + 0.1 * jax.random.normal(k5, (C,), jnp.float32)
            gnb = 0.1 * jax.random.normal(k6, (C,), jnp.float32)
            w1 = jax.random.normal(k1, (C, H), jnp.float32) * 0.05
            b1 = jax.random.normal(k2, (H,), jnp.float32) * 0.05
            w2 = jax.random.normal(k3, (H, OC), jnp.float32) * 0.05
            b2 = jax.random.normal(k4, (OC,), jnp.float32) * 0.05
            return (gnw, gnb, w1, b1, w2, b2)

        self.mask_params = []
        self.res_params = []
        for subband in self.subbands:
            key, km, kr = jax.random.split(key, 3)
            self.mask_params.append(make_band_params(km, subband))
            self.res_params.append(make_band_params(kr, subband))

        self._pack_params()
        self._stack_cache = {}

    # ------------------------------------------------------------------ #
    def _pack_params(self):
        """Per band: fold GN affine into conv1, concat the two branches'
        conv1 weights along N (C, 2H), merge value/gate of conv2 into one
        lane-dense (H, 2P) weight per branch."""
        self.band_P = []
        self.band_w1, self.band_b1 = [], []
        self.band_w2m, self.band_b2m = [], []
        self.band_w2r, self.band_b2r = [], []
        for k, sb in enumerate(self.subbands):
            half = 2 * sb * self.num_spk
            P = _round_up(half, 128)
            self.band_P.append(P)
            w1_cat, b1_cat, w2_ag, b2_ag = [], [], [], []
            for params in (self.mask_params[k], self.res_params[k]):
                gnw, gnb, w1, b1, w2, b2 = params
                w1_cat.append(gnw[:, None] * w1)                 # (C, H)
                b1_cat.append(b1 + gnb @ w1)                     # (H,)
                w2a = jnp.pad(w2[:, :half], ((0, 0), (0, P - half)))
                w2g = jnp.pad(w2[:, half:], ((0, 0), (0, P - half)))
                b2a = jnp.pad(b2[:half], (0, P - half))
                b2g = jnp.pad(b2[half:], (0, P - half))
                w2_ag.append(jnp.concatenate([w2a, w2g], axis=1))     # (H, 2P)
                b2_ag.append(jnp.concatenate([b2a, b2g])[None, :])    # (1, 2P)
            self.band_w1.append(
                jnp.concatenate(w1_cat, axis=1).astype(jnp.bfloat16))  # (C, 2H)
            self.band_b1.append(jnp.concatenate(b1_cat)[None, :])      # (1, 2H)
            self.band_w2m.append(w2_ag[0].astype(jnp.bfloat16))
            self.band_b2m.append(b2_ag[0])
            self.band_w2r.append(w2_ag[1].astype(jnp.bfloat16))
            self.band_b2r.append(b2_ag[1])

    def _bucket_weights(self, idxs):
        key = tuple(idxs)
        if key not in self._stack_cache:
            self._stack_cache[key] = (
                jnp.stack([self.band_w1[k] for k in idxs]),
                jnp.stack([self.band_b1[k] for k in idxs]),
                jnp.stack([self.band_w2m[k] for k in idxs]),
                jnp.stack([self.band_b2m[k] for k in idxs]),
                jnp.stack([self.band_w2r[k] for k in idxs]),
                jnp.stack([self.band_b2r[k] for k in idxs]),
            )
        return self._stack_cache[key]

    @staticmethod
    def _vmem_limit(tT, C, H, P):
        bf16, f32 = 2, 4
        tiles = 2 * (tT * C * bf16 + 2 * tT * P * bf16)          # double-buffered
        weights = 2 * (C * 2 * H * bf16 + 2 * H * f32
                       + 2 * (H * 2 * P * bf16 + 2 * P * f32))
        scratch = (tT * C * (f32 + bf16) + tT * 2 * H * (f32 + bf16)
                   + 2 * tT * 2 * P * (f32 + bf16))
        est = int(1.5 * (tiles + weights + scratch))
        # 64 MiB cap: v7x physical VMEM per TensorCore.
        return max(32 * 1024 * 1024, min(64 * 1024 * 1024, est))

    # ------------------------------------------------------------------ #
    def __call__(self, x):
        x = jnp.asarray(x, jnp.float32)
        B, N, T, K_in = x.shape
        assert N == self.channels, (N, self.channels)
        K = min(len(self.subbands), K_in)        # PyTorch loop breaks at K_in
        C, H = self.channels, self.hidden

        # (B, C, T, K) -> (K, B, T, C): single transpose, channels on lanes.
        xt = jnp.transpose(x[..., :K], (3, 0, 2, 1))
        # GroupNorm(1 group) stats per (band, batch) from the f32 source.
        mean = jnp.mean(xt, axis=(2, 3))                         # (K, B)
        rstd = jax.lax.rsqrt(jnp.var(xt, axis=(2, 3)) + EPS)     # (K, B)
        # bf16 activation stream (halves the x HBM read inside the kernel).
        xb = xt.astype(jnp.bfloat16)

        # Time tiling (multiple-of-8 tiles; ragged T padded, sliced off later).
        if T > self.t_tile:
            tT = self.t_tile
            T_pad = _round_up(T, tT)
            if T_pad != T:
                xb = jnp.pad(xb, ((0, 0), (0, 0), (0, T_pad - T), (0, 0)))
        else:
            tT, T_pad = T, T
        nT = T_pad // tT

        # Bucket bands by padded GLU output width.
        buckets = {}
        for k in range(K):
            buckets.setdefault(self.band_P[k], []).append(k)

        mask_parts = [None] * K
        res_parts = [None] * K
        for P, idxs in sorted(buckets.items()):
            Kb = len(idxs)
            w1, b1, w2m, b2m, w2r, b2r = self._bucket_weights(idxs)
            if Kb == K:
                xb_b, mean_b, rstd_b = xb, mean, rstd
            else:
                sel = jnp.asarray(idxs, jnp.int32)
                xb_b = jnp.take(xb, sel, axis=0)
                mean_b = jnp.take(mean, sel, axis=0)
                rstd_b = jnp.take(rstd, sel, axis=0)
            mean_b = mean_b.reshape(-1)                          # (Kb*B,)
            rstd_b = rstd_b.reshape(-1)

            grid = (Kb, B, nT)                   # band OUTERMOST: weights are
            #                                      DMA'd once per band, reused
            #                                      across all (B, nT) steps.
            om, orr = pl.pallas_call(
                fused_band_kernel,
                out_shape=(
                    jax.ShapeDtypeStruct((Kb, B, T_pad, P), jnp.bfloat16),
                    jax.ShapeDtypeStruct((Kb, B, T_pad, P), jnp.bfloat16),
                ),
                grid_spec=pltpu.PrefetchScalarGridSpec(
                    num_scalar_prefetch=2,
                    grid=grid,
                    in_specs=[
                        pl.BlockSpec((1, 1, tT, C), lambda k, b, t, *_: (k, b, t, 0)),
                        pl.BlockSpec((1, C, 2 * H), lambda k, b, t, *_: (k, 0, 0)),
                        pl.BlockSpec((1, 1, 2 * H), lambda k, b, t, *_: (k, 0, 0)),
                        pl.BlockSpec((1, H, 2 * P), lambda k, b, t, *_: (k, 0, 0)),
                        pl.BlockSpec((1, 1, 2 * P), lambda k, b, t, *_: (k, 0, 0)),
                        pl.BlockSpec((1, H, 2 * P), lambda k, b, t, *_: (k, 0, 0)),
                        pl.BlockSpec((1, 1, 2 * P), lambda k, b, t, *_: (k, 0, 0)),
                    ],
                    out_specs=[
                        pl.BlockSpec((1, 1, tT, P), lambda k, b, t, *_: (k, b, t, 0)),
                        pl.BlockSpec((1, 1, tT, P), lambda k, b, t, *_: (k, b, t, 0)),
                    ],
                ),
                compiler_params=pltpu.CompilerParams(
                    dimension_semantics=("parallel", "parallel", "arbitrary"),
                    vmem_limit_bytes=self._vmem_limit(tT, C, H, P)),
            )(mean_b, rstd_b, xb_b, w1, b1, w2m, b2m, w2r, b2r)

            om = om[:, :, :T, :].astype(jnp.float32)             # drop T pad
            orr = orr[:, :, :T, :].astype(jnp.float32)
            for j, k in enumerate(idxs):
                half = 2 * self.subbands[k] * self.num_spk
                mask_parts[k] = om[j, :, :, :half]               # (B, T, half)
                res_parts[k] = orr[j, :, :, :half]

        return (self._assemble(mask_parts, B, T),
                self._assemble(res_parts, B, T))

    def _assemble(self, parts, B, T):
        outs = [p.reshape(B, T, self.num_spk, -1, 2) for p in parts]
        cat = jnp.concatenate(outs, axis=3)                      # (B,T,spk,F',2)
        padf = self.freq_dim - cat.shape[3]
        if padf > 0:
            cat = jnp.pad(cat, ((0, 0), (0, 0), (0, 0), (0, padf), (0, 0)))
        return jnp.moveaxis(cat, 1, 2)                           # (B,spk,T,F,2)

    # ------------------------------------------------------------------ #
    def reference(self, x):
        """Pure-JAX f32 reference with the original (unfused, unfolded) math."""
        x = jnp.asarray(x, jnp.float32)
        B, N, T, K_in = x.shape
        K = min(len(self.subbands), K_in)

        def branch(params_list):
            parts = []
            for k in range(K):
                sb = self.subbands[k]
                gnw, gnb, w1, b1, w2, b2 = params_list[k]
                xb = jnp.transpose(x[:, :, :, k], (0, 2, 1))     # (B, T, C)
                mean = jnp.mean(xb, axis=(1, 2), keepdims=True)
                var = jnp.var(xb, axis=(1, 2), keepdims=True)
                xn = (xb - mean) * jax.lax.rsqrt(var + EPS) * gnw + gnb
                h = jnp.tanh(xn @ w1 + b1)
                y = h @ w2 + b2
                half = y.shape[-1] // 2
                o = y[..., :half] * jax.nn.sigmoid(y[..., half:])
                parts.append(o.reshape(B, T, self.num_spk, sb, 2))
            cat = jnp.concatenate(parts, axis=3)
            padf = self.freq_dim - cat.shape[3]
            if padf > 0:
                cat = jnp.pad(cat, ((0, 0), (0, 0), (0, 0), (0, padf), (0, 0)))
            return jnp.moveaxis(cat, 1, 2)

        return branch(self.mask_params), branch(self.res_params)


if __name__ == "__main__":
    key = jax.random.PRNGKey(0)
    kx, kp, kx2, kp2 = jax.random.split(key, 4)

    # Test 1: homogeneous subbands (single output-width bucket), one time tile.
    B, C, T = 2, 16, 8
    subbands = (4, 4, 8)
    freq_dim = sum(subbands)
    K = len(subbands)
    x = jax.random.normal(kx, (B, C, T, K), jnp.float32)
    dec = MaskDecoderPallas(freq_dim, subbands, channels=C, num_spk=1, key=kp)
    m, r = dec(x)
    m = jax.block_until_ready(m)
    r = jax.block_until_ready(r)
    assert m.shape == (B, 1, T, freq_dim, 2), m.shape
    assert r.shape == (B, 1, T, freq_dim, 2), r.shape
    m_ref, r_ref = dec.reference(x)
    err_m = float(jnp.max(jnp.abs(m - m_ref)))
    err_r = float(jnp.max(jnp.abs(r - r_ref)))
    assert err_m < 2e-2, err_m
    assert err_r < 2e-2, err_r

    # Test 2: heterogeneous subbands (two width buckets) + time tiling with a
    # ragged T (exercises the bucketed / tiled / padded paths).
    B2, T2 = 1, 20
    subbands2 = (4, 70)
    freq2 = sum(subbands2)
    x2 = jax.random.normal(kx2, (B2, C, T2, len(subbands2)), jnp.float32)
    dec2 = MaskDecoderPallas(freq2, subbands2, channels=C, num_spk=1,
                             key=kp2, t_tile=8)
    m2, r2 = dec2(x2)
    m2 = jax.block_until_ready(m2)
    r2 = jax.block_until_ready(r2)
    assert m2.shape == (B2, 1, T2, freq2, 2), m2.shape
    assert r2.shape == (B2, 1, T2, freq2, 2), r2.shape
    m2_ref, r2_ref = dec2.reference(x2)
    assert float(jnp.max(jnp.abs(m2 - m2_ref))) < 2e-2
    assert float(jnp.max(jnp.abs(r2 - r2_ref))) < 2e-2

    print("KERNEL_OK")
</pallas_src>

<mosaic_0001>
module attributes {stable_mosaic.version = 11 : i64} {
  func.func @fused_band_kernel(%arg0: i32, %arg1: i32, %arg2: i32, %arg3: memref<6xf32, #tpu.memory_space<smem>>, %arg4: memref<6xf32, #tpu.memory_space<smem>>, %arg5: memref<1x1x8x16xbf16, #tpu.memory_space<vmem>>, %arg6: memref<1x16x128xbf16, #tpu.memory_space<vmem>>, %arg7: memref<1x1x128xf32, #tpu.memory_space<vmem>>, %arg8: memref<1x64x256xbf16, #tpu.memory_space<vmem>>, %arg9: memref<1x1x256xf32, #tpu.memory_space<vmem>>, %arg10: memref<1x64x256xbf16, #tpu.memory_space<vmem>>, %arg11: memref<1x1x256xf32, #tpu.memory_space<vmem>>, %arg12: memref<1x1x8x128xbf16, #tpu.memory_space<vmem>>, %arg13: memref<1x1x8x128xbf16, #tpu.memory_space<vmem>>) attributes {dimension_semantics = [#tpu.dimension_semantics<parallel>, #tpu.dimension_semantics<parallel>, #tpu.dimension_semantics<arbitrary>], iteration_bounds = array<i64: 3, 2, 1>, scalar_prefetch = 2 : i64, scratch_operands = 0 : i64, tpu.core_type = #tpu.core_type<tc>, window_params = [{transform_indices = @transform_0, window_bounds = array<i64: 1, 1, 8, 16>}, {transform_indices = @transform_1, window_bounds = array<i64: 1, 16, 128>}, {transform_indices = @transform_2, window_bounds = array<i64: 1, 1, 128>}, {transform_indices = @transform_3, window_bounds = array<i64: 1, 64, 256>}, {transform_indices = @transform_4, window_bounds = array<i64: 1, 1, 256>}, {transform_indices = @transform_5, window_bounds = array<i64: 1, 64, 256>}, {transform_indices = @transform_6, window_bounds = array<i64: 1, 1, 256>}, {transform_indices = @transform_7, window_bounds = array<i64: 1, 1, 8, 128>}, {transform_indices = @transform_8, window_bounds = array<i64: 1, 1, 8, 128>}]} {
    %c2_i32 = arith.constant 2 : i32
    %0 = arith.muli %arg0, %c2_i32 : i32
    %1 = arith.addi %0, %arg1 : i32
    %2 = arith.index_cast %1 : i32 to index
    %3 = memref.load %arg3[%2] : memref<6xf32, #tpu.memory_space<smem>>
    %4 = arith.index_cast %1 : i32 to index
    %5 = memref.load %arg4[%4] : memref<6xf32, #tpu.memory_space<smem>>
    %c0 = arith.constant 0 : index
    %c0_0 = arith.constant 0 : index
    %c0_1 = arith.constant 0 : index
    %c0_2 = arith.constant 0 : index
    %6 = vector.load %arg5[%c0, %c0_0, %c0_1, %c0_2] : memref<1x1x8x16xbf16, #tpu.memory_space<vmem>>, vector<1x1x8x16xbf16>
    %7 = vector.shape_cast %6 : vector<1x1x8x16xbf16> to vector<8x16xbf16>
    %8 = arith.extf %7 : vector<8x16xbf16> to vector<8x16xf32>
    %9 = vector.broadcast %3 : f32 to vector<8x16xf32>
    %10 = arith.subf %8, %9 : vector<8x16xf32>
    %11 = vector.broadcast %5 : f32 to vector<8x16xf32>
    %12 = arith.mulf %10, %11 : vector<8x16xf32>
    %13 = arith.truncf %12 : vector<8x16xf32> to vector<8x16xbf16>
    %c0_3 = arith.constant 0 : index
    %c0_4 = arith.constant 0 : index
    %c0_5 = arith.constant 0 : index
    %14 = vector.load %arg6[%c0_3, %c0_4, %c0_5] : memref<1x16x128xbf16, #tpu.memory_space<vmem>>, vector<1x16x128xbf16>
    %15 = vector.shape_cast %14 : vector<1x16x128xbf16> to vector<16x128xbf16>
    %cst = arith.constant dense<0.000000e+00> : vector<8x128xf32>
    %16 = tpu.matmul %13, %15, %cst {dimension_numbers = #tpu.dot_dimension_numbers<[1], [0], [0], [1], [0, 0, 1, 1], [], []>} : vector<8x16xbf16>, vector<16x128xbf16>, vector<8x128xf32> -> vector<8x128xf32>
    %c0_6 = arith.constant 0 : index
    %c0_7 = arith.constant 0 : index
    %c0_8 = arith.constant 0 : index
    %17 = vector.load %arg7[%c0_6, %c0_7, %c0_8] : memref<1x1x128xf32, #tpu.memory_space<vmem>>, vector<1x1x128xf32>
    %18 = vector.shape_cast %17 : vector<1x1x128xf32> to vector<1x128xf32>
    %19 = vector.broadcast %18 : vector<1x128xf32> to vector<8x128xf32>
    %20 = arith.addf %16, %19 : vector<8x128xf32>
    %21 = arith.truncf %20 : vector<8x128xf32> to vector<8x128xbf16>
    %22 = math.tanh %21 : vector<8x128xbf16>
    %23 = vector.extract_strided_slice %22 {offsets = [0, 0], sizes = [8, 64], strides = [1, 1]} : vector<8x128xbf16> to vector<8x64xbf16>
    %c0_9 = arith.constant 0 : index
    %c0_10 = arith.constant 0 : index
    %c0_11 = arith.constant 0 : index
    %24 = vector.load %arg8[%c0_9, %c0_10, %c0_11] : memref<1x64x256xbf16, #tpu.memory_space<vmem>>, vector<1x64x256xbf16>
    %25 = vector.shape_cast %24 : vector<1x64x256xbf16> to vector<64x256xbf16>
    %cst_12 = arith.constant dense<0.000000e+00> : vector<8x256xf32>
    %26 = tpu.matmul %23, %25, %cst_12 {dimension_numbers = #tpu.dot_dimension_numbers<[1], [0], [0], [1], [0, 0, 1, 1], [], []>} : vector<8x64xbf16>, vector<64x256xbf16>, vector<8x256xf32> -> vector<8x256xf32>
    %c0_13 = arith.constant 0 : index
    %c0_14 = arith.constant 0 : index
    %c0_15 = arith.constant 0 : index
    %27 = vector.load %arg9[%c0_13, %c0_14, %c0_15] : memref<1x1x256xf32, #tpu.memory_space<vmem>>, vector<1x1x256xf32>
    %28 = vector.shape_cast %27 : vector<1x1x256xf32> to vector<1x256xf32>
    %29 = vector.broadcast %28 : vector<1x256xf32> to vector<8x256xf32>
    %30 = arith.addf %26, %29 : vector<8x256xf32>
    %31 = vector.extract_strided_slice %22 {offsets = [0, 64], sizes = [8, 64], strides = [1, 1]} : vector<8x128xbf16> to vector<8x64xbf16>
    %c0_16 = arith.constant 0 : index
    %c0_17 = arith.constant 0 : index
    %c0_18 = arith.constant 0 : index
    %32 = vector.load %arg10[%c0_16, %c0_17, %c0_18] : memref<1x64x256xbf16, #tpu.memory_space<vmem>>, vector<1x64x256xbf16>
    %33 = vector.shape_cast %32 : vector<1x64x256xbf16> to vector<64x256xbf16>
    %cst_19 = arith.constant dense<0.000000e+00> : vector<8x256xf32>
    %34 = tpu.matmul %31, %33, %cst_19 {dimension_numbers = #tpu.dot_dimension_numbers<[1], [0], [0], [1], [0, 0, 1, 1], [], []>} : vector<8x64xbf16>, vector<64x256xbf16>, vector<8x256xf32> -> vector<8x256xf32>
    %c0_20 = arith.constant 0 : index
    %c0_21 = arith.constant 0 : index
    %c0_22 = arith.constant 0 : index
    %35 = vector.load %arg11[%c0_20, %c0_21, %c0_22] : memref<1x1x256xf32, #tpu.memory_space<vmem>>, vector<1x1x256xf32>
    %36 = vector.shape_cast %35 : vector<1x1x256xf32> to vector<1x256xf32>
    %37 = vector.broadcast %36 : vector<1x256xf32> to vector<8x256xf32>
    %38 = arith.addf %34, %37 : vector<8x256xf32>
    %39 = vector.extract_strided_slice %30 {offsets = [0, 0], sizes = [8, 128], strides = [1, 1]} : vector<8x256xf32> to vector<8x128xf32>
    %40 = vector.extract_strided_slice %30 {offsets = [0, 128], sizes = [8, 128], strides = [1, 1]} : vector<8x256xf32> to vector<8x128xf32>
    %41 = arith.negf %40 : vector<8x128xf32>
    %42 = math.exp %41 : vector<8x128xf32>
    %cst_23 = arith.constant 1.000000e+00 : f32
    %43 = vector.broadcast %cst_23 : f32 to vector<8x128xf32>
    %44 = arith.addf %43, %42 : vector<8x128xf32>
    %45 = arith.divf %43, %44 : vector<8x128xf32>
    %46 = arith.mulf %39, %45 : vector<8x128xf32>
    %47 = arith.truncf %46 : vector<8x128xf32> to vector<8x128xbf16>
    %c0_24 = arith.constant 0 : index
    %c0_25 = arith.constant 0 : index
    %c0_26 = arith.constant 0 : index
    %c0_27 = arith.constant 0 : index
    %48 = vector.load %arg12[%c0_24, %c0_25, %c0_26, %c0_27] : memref<1x1x8x128xbf16, #tpu.memory_space<vmem>>, vector<1x1x8x128xbf16>
    %49 = vector.shape_cast %48 : vector<1x1x8x128xbf16> to vector<8x128xbf16>
    %50 = vector.shape_cast %47 : vector<8x128xbf16> to vector<1x1x8x128xbf16>
    tpu.vector_store %arg12[%c0_24, %c0_25, %c0_26, %c0_27], %50 {strides = array<i32>} : memref<1x1x8x128xbf16, #tpu.memory_space<vmem>>, vector<1x1x8x128xbf16>,
    %51 = vector.extract_strided_slice %38 {offsets = [0, 0], sizes = [8, 128], strides = [1, 1]} : vector<8x256xf32> to vector<8x128xf32>
    %52 = vector.extract_strided_slice %38 {offsets = [0, 128], sizes = [8, 128], strides = [1, 1]} : vector<8x256xf32> to vector<8x128xf32>
    %53 = arith.negf %52 : vector<8x128xf32>
    %54 = math.exp %53 : vector<8x128xf32>
    %cst_28 = arith.constant 1.000000e+00 : f32
    %55 = vector.broadcast %cst_28 : f32 to vector<8x128xf32>
    %56 = arith.addf %55, %54 : vector<8x128xf32>
    %57 = arith.divf %55, %56 : vector<8x128xf32>
    %58 = arith.mulf %51, %57 : vector<8x128xf32>
    %59 = arith.truncf %58 : vector<8x128xf32> to vector<8x128xbf16>
    %c0_29 = arith.constant 0 : index
    %c0_30 = arith.constant 0 : index
    %c0_31 = arith.constant 0 : index
    %c0_32 = arith.constant 0 : index
    %60 = vector.load %arg13[%c0_29, %c0_30, %c0_31, %c0_32] : memref<1x1x8x128xbf16, #tpu.memory_space<vmem>>, vector<1x1x8x128xbf16>
    %61 = vector.shape_cast %60 : vector<1x1x8x128xbf16> to vector<8x128xbf16>
    %62 = vector.shape_cast %59 : vector<8x128xbf16> to vector<1x1x8x128xbf16>
    tpu.vector_store %arg13[%c0_29, %c0_30, %c0_31, %c0_32], %62 {strides = array<i32>} : memref<1x1x8x128xbf16, #tpu.memory_space<vmem>>, vector<1x1x8x128xbf16>,
    return
  }
  func.func @transform_0(%arg0: i32, %arg1: i32, %arg2: i32, %arg3: memref<6xf32, #tpu.memory_space<smem>>, %arg4: memref<6xf32, #tpu.memory_space<smem>>) -> (i32, i32, i32, i32) {
    %c0_i32 = arith.constant 0 : i32
    %c0_i32_0 = arith.constant 0 : i32
    return %arg0, %arg1, %arg2, %c0_i32 : i32, i32, i32, i32
  }
  func.func @transform_1(%arg0: i32, %arg1: i32, %arg2: i32, %arg3: memref<6xf32, #tpu.memory_space<smem>>, %arg4: memref<6xf32, #tpu.memory_space<smem>>) -> (i32, i32, i32) {
    %c0_i32 = arith.constant 0 : i32
    %c0_i32_0 = arith.constant 0 : i32
    %c0_i32_1 = arith.constant 0 : i32
    return %arg0, %c0_i32, %c0_i32_0 : i32, i32, i32
  }
  func.func @transform_2(%arg0: i32, %arg1: i32, %arg2: i32, %arg3: memref<6xf32, #tpu.memory_space<smem>>, %arg4: memref<6xf32, #tpu.memory_space<smem>>) -> (i32, i32, i32) {
    %c0_i32 = arith.constant 0 : i32
    %c0_i32_0 = arith.constant 0 : i32
    %c0_i32_1 = arith.constant 0 : i32
    return %arg0, %c0_i32, %c0_i32_0 : i32, i32, i32
  }
  func.func @transform_3(%arg0: i32, %arg1: i32, %arg2: i32, %arg3: memref<6xf32, #tpu.memory_space<smem>>, %arg4: memref<6xf32, #tpu.memory_space<smem>>) -> (i32, i32, i32) {
    %c0_i32 = arith.constant 0 : i32
    %c0_i32_0 = arith.constant 0 : i32
    %c0_i32_1 = arith.constant 0 : i32
    return %arg0, %c0_i32, %c0_i32_0 : i32, i32, i32
  }
  func.func @transform_4(%arg0: i32, %arg1: i32, %arg2: i32, %arg3: memref<6xf32, #tpu.memory_space<smem>>, %arg4: memref<6xf32, #tpu.memory_space<smem>>) -> (i32, i32, i32) {
    %c0_i32 = arith.constant 0 : i32
    %c0_i32_0 = arith.constant 0 : i32
    %c0_i32_1 = arith.constant 0 : i32
    return %arg0, %c0_i32, %c0_i32_0 : i32, i32, i32
  }
  func.func @transform_5(%arg0: i32, %arg1: i32, %arg2: i32, %arg3: memref<6xf32, #tpu.memory_space<smem>>, %arg4: memref<6xf32, #tpu.memory_space<smem>>) -> (i32, i32, i32) {
    %c0_i32 = arith.constant 0 : i32
    %c0_i32_0 = arith.constant 0 : i32
    %c0_i32_1 = arith.constant 0 : i32
    return %arg0, %c0_i32, %c0_i32_0 : i32, i32, i32
  }
  func.func @transform_6(%arg0: i32, %arg1: i32, %arg2: i32, %arg3: memref<6xf32, #tpu.memory_space<smem>>, %arg4: memref<6xf32, #tpu.memory_space<smem>>) -> (i32, i32, i32) {
    %c0_i32 = arith.constant 0 : i32
    %c0_i32_0 = arith.constant 0 : i32
    %c0_i32_1 = arith.constant 0 : i32
    return %arg0, %c0_i32, %c0_i32_0 : i32, i32, i32
  }
  func.func @transform_7(%arg0: i32, %arg1: i32, %arg2: i32, %arg3: memref<6xf32, #tpu.memory_space<smem>>, %arg4: memref<6xf32, #tpu.memory_space<smem>>) -> (i32, i32, i32, i32) {
    %c0_i32 = arith.constant 0 : i32
    %c0_i32_0 = arith.constant 0 : i32
    return %arg0, %arg1, %arg2, %c0_i32 : i32, i32, i32, i32
  }
  func.func @transform_8(%arg0: i32, %arg1: i32, %arg2: i32, %arg3: memref<6xf32, #tpu.memory_space<smem>>, %arg4: memref<6xf32, #tpu.memory_space<smem>>) -> (i32, i32, i32, i32) {
    %c0_i32 = arith.constant 0 : i32
    %c0_i32_0 = arith.constant 0 : i32
    return %arg0, %arg1, %arg2, %c0_i32 : i32, i32, i32, i32
  }
}

</mosaic_0001>

<llo_original>
// kernel: tpu_custom_call.1
$region0: #{tpu_custom_call.1}
  #allocation0 [shape = 'u32[]', space=smem, size = 0x4, offset = 0x4, fixed_abs, tag = 'smem constant byte address 0x4 - core index']
  #allocation1 [shape = 'u32[144,128]{1,0:T(1,128)}', space=vmem, size = 0x12000, scoped, tag = 'internal scratch']
  #allocation2 [shape = 's32[1]{0}', space=sflag, size = 0x4, scoped, tag = 'scoped memory for tpu_custom_call.1']
  #allocation3 [shape = 'u8[512]{0}', space=smem, size = 0x200, scoped, tag = 'prefetched SMEM operand 0']
  #allocation4 [shape = 'u8[512]{0}', space=smem, size = 0x200, scoped, tag = 'prefetched SMEM operand 1']
  %s0 = inlined_call_operand.hbm [shape: f32[6], index: 0, kind: input, shape index: {}]
  %s1 = inlined_call_operand.hbm [shape: f32[6], index: 1, kind: input, shape index: {}]
  %s2 = inlined_call_operand.hbm [shape: bf16[3,2,8,16], index: 2, kind: input, shape index: {}]
  %s3 = inlined_call_operand.hbm [shape: bf16[3,16,128], index: 3, kind: input, shape index: {}]
  %s4 = inlined_call_operand.hbm [shape: f32[3,1,128], index: 4, kind: input, shape index: {}]
  %s5 = inlined_call_operand.hbm [shape: bf16[3,64,256], index: 5, kind: input, shape index: {}]
  %s6 = inlined_call_operand.vmem [shape: f32[3,1,256], index: 6, kind: input, shape index: {}]
  %s7 = inlined_call_operand.hbm [shape: bf16[3,64,256], index: 7, kind: input, shape index: {}]
  %s8 = inlined_call_operand.vmem [shape: f32[3,1,256], index: 8, kind: input, shape index: {}]
  %s9 = inlined_call_operand.hbm [shape: bf16[3,2,8,128], index: 9, kind: output, shape index: {0}]
  %s10 = inlined_call_operand.hbm [shape: bf16[3,2,8,128], index: 10, kind: output, shape index: {1}]
  %11 = xla_tuple %s9, %s10
  %s12 = sld [smem:[#allocation0]]
  $region89: #{tpu_custom_call.1} parent=0
    _
  %s14 = ssub.s32 1, %s12
  %s15 = scalar_select 0, %s14, %s12
  %17 = dma.hbm_to_smem %s0, 16, [#allocation3], [#allocation2]
  %19 = dma.hbm_to_smem %s1, 16, [#allocation4], [#allocation2]
  %20 = dma.done [#allocation2], 32
  %21 = sfence
  $region1: #{tpu_custom_call.1} parent=0
    #allocation5 [shape = 'u8[4096]{0}', space=vmem, size = 0x1000, scoped, tag = 'input window, operand 2']
    #allocation6 [shape = 's32[2]{0}', space=sflag, size = 0x8, scoped, tag = 'scoped memory for tpu_custom_call.1']
    #allocation7 [shape = 's32[2]{0}', space=sflag, size = 0x8, scoped, tag = 'scoped memory for tpu_custom_call.1']
    #allocation8 [shape = 'u8[8192]{0}', space=vmem, size = 0x2000, scoped, tag = 'input window, operand 3']
    #allocation9 [shape = 's32[2]{0}', space=sflag, size = 0x8, scoped, tag = 'scoped memory for tpu_custom_call.1']
    #allocation10 [shape = 'u8[1024]{0}', space=vmem, size = 0x400, scoped, tag = 'input window, operand 4']
    #allocation11 [shape = 'u8[65536]{0}', space=vmem, size = 0x10000, scoped, tag = 'input window, operand 5']
    #allocation12 [shape = 's32[2]{0}', space=sflag, size = 0x8, scoped, tag = 'scoped memory for tpu_custom_call.1']
    #allocation13 [shape = 'u8[65536]{0}', space=vmem, size = 0x10000, scoped, tag = 'input window, operand 7']
    #allocation14 [shape = 'u8[4096]{0}', space=vmem, size = 0x1000, scoped, tag = 'output window, operand 0']
    #allocation15 [shape = 'u8[4096]{0}', space=vmem, size = 0x1000, scoped, tag = 'output window, operand 1']
    #allocation16 [shape = 's32[2]{0}', space=sflag, size = 0x8, scoped, tag = 'scoped memory for tpu_custom_call.1']
    %22 = vsyncpa [#allocation6], 0
    %s23 = scalar_lea.sflag [#allocation6], 1
    %24 = vsyncpa %s23, 0
    %25 = vsyncpa [#allocation9], 0
    %s26 = scalar_lea.sflag [#allocation9], 1
    %27 = vsyncpa %s26, 0
    %28 = vsyncpa [#allocation12], 0
    %s29 = scalar_lea.sflag [#allocation12], 1
    %30 = vsyncpa %s29, 0
    %31 = vsyncpa [#allocation7], 0
    %s32 = scalar_lea.sflag [#allocation7], 1
    %33 = vsyncpa %s32, 0
    %34 = vsyncpa [#allocation16], 0
    %s35 = scalar_lea.sflag [#allocation16], 1
    %36 = vsyncpa %s35, 0
    loop: start=0, step=1, limit=8
    $region2: #{tpu_custom_call.1} parent=1 // loop_pre_header
      _
    $region3: #{tpu_custom_call.1} parent=1 // loop_header
      %s38 = sphi 0, %s42
      %p39 = scmp.ge.s32.totalorder %s38, 8
      %s45 = sphi 0, %s64
      %s46 = sphi 0, %s60
      %s47 = sphi 0, %s56
      %s48 = sphi 0, %s45
      %s49 = sphi 0, %s46
      %s50 = sphi 0, %s47
      %s51 = sphi 0, %s48
      %s52 = sphi 0, %s49
      %s53 = sphi 0, %s50
      %s71 = sphi 0, %s73
      %s74 = sphi 0, %s71
      %s75 = sphi 0, %s74
      %s91 = sphi 0, %s75
      %s97 = sphi 0, %s99
      %s100 = sphi 0, %s97
      %s101 = sphi 0, %s100
      %s117 = sphi 0, %s101
      %s123 = sphi 0, %s125
      %s126 = sphi 0, %s123
      %s127 = sphi 0, %s126
      %s143 = sphi 0, %s127
      %s149 = sphi 0, %s151
      %s152 = sphi 0, %s149
      %s153 = sphi 0, %s152
      %s169 = sphi 0, %s153
      %s175 = sphi 0, %s177
      %s178 = sphi 0, %s175
      %s179 = sphi 0, %s178
      %s195 = sphi 0, %s179
      %s201 = sphi 0, %s203
      %s204 = sphi 0, %s201
      %s205 = sphi 0, %s204
      %s221 = sphi 0, %s205
      %s227 = sphi 0, %s229
      %s230 = sphi 0, %s227
      %s231 = sphi 0, %s230
      %s247 = sphi 0, %s231
      %s257 = sphi 0, %s259
      %s260 = sphi 0, %s257
      %s261 = sphi 0, %s260
      %s277 = sphi 0, %s261
      %s287 = sphi 0, %s289
      %s290 = sphi 0, %s287
      %s291 = sphi 0, %s290
      %s307 = sphi 0, %s291
    $region4: #{tpu_custom_call.1} parent=1 // loop_header_branch
      %41 = sbr.rel (%p39) target = $region8
    $region5: #{tpu_custom_call.1} parent=1 // loop_body
      %s43 = ssub.s32 %s38, 1
      %s44 = ssub.s32 %s38, 2
      %s54 = sadd.s32 1, %s47
      %p55 = scmp.ge.s32.totalorder %s54, 1
      %s56 = scalar_select %p55, 0, %s54
      %s57 = sadd.s32 1, %s46
      %s58 = scalar_select %p55, %s57, %s46
      %p59 = scmp.ge.s32.totalorder %s58, 2
      %s60 = scalar_select %p59, 0, %s58
      %s61 = sadd.s32 1, %s45
      %s62 = scalar_select %p59, %s61, %s45
      %p63 = scmp.ge.s32.totalorder %s62, 3
      %s64 = scalar_select %p63, 0, %s62
      %s65 = ssub.s32 %s45, %s64
      %s66 = ssub.s32 %s46, %s60
      %s67 = sor.u32 %s65, %s66
      %s68 = ssub.s32 %s47, %s56
      %s69 = sor.u32 %s67, %s68
      %p70 = scmp.eq.s32.totalorder %s69, 0
      %s72 = sadd.s32 %s71, 1
      %s73 = scalar_select %p70, %s71, %s72
      %p76 = pneg %p70
      %p77 = scmp.eq.s32.totalorder %s38, 5
      %p78 = por %p76, %p77
      %p79 = scmp.ne.s32.totalorder %s71, %s74
      %p80 = scmp.eq.s32.totalorder %s38, 0
      %p81 = por %p79, %p80
      %p82 = scmp.ne.s32.totalorder %s71, %s74
      %p83 = scmp.eq.s32.totalorder %s43, 5
      %p84 = por %p82, %p83
      %p85 = scmp.ne.s32.totalorder %s74, %s75
      %p86 = scmp.eq.s32.totalorder %s43, 0
      %p87 = por %p85, %p86
      %p88 = scmp.ne.s32.totalorder %s74, %s75
      %p89 = scmp.eq.s32.totalorder %s44, 5
      %p90 = por %p88, %p89
      %p92 = scmp.ne.s32.totalorder %s75, %s91
      %p93 = scmp.eq.s32.totalorder %s44, 0
      %p94 = por %p92, %p93
      %s95 = ssub.s32 %s45, %s64
      %p96 = scmp.eq.s32.totalorder %s95, 0
      %s98 = sadd.s32 %s97, 1
      %s99 = scalar_select %p96, %s97, %s98
      %p102 = pneg %p96
      %p103 = scmp.eq.s32.totalorder %s38, 5
      %p104 = por %p102, %p103
      %p105 = scmp.ne.s32.totalorder %s97, %s100
      %p106 = scmp.eq.s32.totalorder %s38, 0
      %p107 = por %p105, %p106
      %p108 = scmp.ne.s32.totalorder %s97, %s100
      %p109 = scmp.eq.s32.totalorder %s43, 5
      %p110 = por %p108, %p109
      %p111 = scmp.ne.s32.totalorder %s100, %s101
      %p112 = scmp.eq.s32.totalorder %s43, 0
      %p113 = por %p111, %p112
      %p114 = scmp.ne.s32.totalorder %s100, %s101
      %p115 = scmp.eq.s32.totalorder %s44, 5
      %p116 = por %p114, %p115
      %p118 = scmp.ne.s32.totalorder %s101, %s117
      %p119 = scmp.eq.s32.totalorder %s44, 0
      %p120 = por %p118, %p119
      %s121 = ssub.s32 %s45, %s64
      %p122 = scmp.eq.s32.totalorder %s121, 0
      %s124 = sadd.s32 %s123, 1
      %s125 = scalar_select %p122, %s123, %s124
      %p128 = pneg %p122
      %p129 = scmp.eq.s32.totalorder %s38, 5
      %p130 = por %p128, %p129
      %p131 = scmp.ne.s32.totalorder %s123, %s126
      %p132 = scmp.eq.s32.totalorder %s38, 0
      %p133 = por %p131, %p132
      %p134 = scmp.ne.s32.totalorder %s123, %s126
      %p135 = scmp.eq.s32.totalorder %s43, 5
      %p136 = por %p134, %p135
      %p137 = scmp.ne.s32.totalorder %s126, %s127
      %p138 = scmp.eq.s32.totalorder %s43, 0
      %p139 = por %p137, %p138
      %p140 = scmp.ne.s32.totalorder %s126, %s127
      %p141 = scmp.eq.s32.totalorder %s44, 5
      %p142 = por %p140, %p141
      %p144 = scmp.ne.s32.totalorder %s127, %s143
      %p145 = scmp.eq.s32.totalorder %s44, 0
      %p146 = por %p144, %p145
      %s147 = ssub.s32 %s45, %s64
      %p148 = scmp.eq.s32.totalorder %s147, 0
      %s150 = sadd.s32 %s149, 1
      %s151 = scalar_select %p148, %s149, %s150
      %p154 = pneg %p148
      %p155 = scmp.eq.s32.totalorder %s38, 5
      %p156 = por %p154, %p155
      %p157 = scmp.ne.s32.totalorder %s149, %s152
      %p158 = scmp.eq.s32.totalorder %s38, 0
      %p159 = por %p157, %p158
      %p160 = scmp.ne.s32.totalorder %s149, %s152
      %p161 = scmp.eq.s32.totalorder %s43, 5
      %p162 = por %p160, %p161
      %p163 = scmp.ne.s32.totalorder %s152, %s153
      %p164 = scmp.eq.s32.totalorder %s43, 0
      %p165 = por %p163, %p164
      %p166 = scmp.ne.s32.totalorder %s152, %s153
      %p167 = scmp.eq.s32.totalorder %s44, 5
      %p168 = por %p166, %p167
      %p170 = scmp.ne.s32.totalorder %s153, %s169
      %p171 = scmp.eq.s32.totalorder %s44, 0
      %p172 = por %p170, %p171
      %s173 = ssub.s32 %s45, %s64
      %p174 = scmp.eq.s32.totalorder %s173, 0
      %s176 = sadd.s32 %s175, 1
      %s177 = scalar_select %p174, %s175, %s176
      %p180 = pneg %p174
      %p181 = scmp.eq.s32.totalorder %s38, 5
      %p182 = por %p180, %p181
      %p183 = scmp.ne.s32.totalorder %s175, %s178
      %p184 = scmp.eq.s32.totalorder %s38, 0
      %p185 = por %p183, %p184
      %p186 = scmp.ne.s32.totalorder %s175, %s178
      %p187 = scmp.eq.s32.totalorder %s43, 5
      %p188 = por %p186, %p187
      %p189 = scmp.ne.s32.totalorder %s178, %s179
      %p190 = scmp.eq.s32.totalorder %s43, 0
      %p191 = por %p189, %p190
      %p192 = scmp.ne.s32.totalorder %s178, %s179
      %p193 = scmp.eq.s32.totalorder %s44, 5
      %p194 = por %p192, %p193
      %p196 = scmp.ne.s32.totalorder %s179, %s195
      %p197 = scmp.eq.s32.totalorder %s44, 0
      %p198 = por %p196, %p197
      %s199 = ssub.s32 %s45, %s64
      %p200 = scmp.eq.s32.totalorder %s199, 0
      %s202 = sadd.s32 %s201, 1
      %s203 = scalar_select %p200, %s201, %s202
      %p206 = pneg %p200
      %p207 = scmp.eq.s32.totalorder %s38, 5
      %p208 = por %p206, %p207
      %p209 = scmp.ne.s32.totalorder %s201, %s204
      %p210 = scmp.eq.s32.totalorder %s38, 0
      %p211 = por %p209, %p210
      %p212 = scmp.ne.s32.totalorder %s201, %s204
      %p213 = scmp.eq.s32.totalorder %s43, 5
      %p214 = por %p212, %p213
      %p215 = scmp.ne.s32.totalorder %s204, %s205
      %p216 = scmp.eq.s32.totalorder %s43, 0
      %p217 = por %p215, %p216
      %p218 = scmp.ne.s32.totalorder %s204, %s205
      %p219 = scmp.eq.s32.totalorder %s44, 5
      %p220 = por %p218, %p219
      %p222 = scmp.ne.s32.totalorder %s205, %s221
      %p223 = scmp.eq.s32.totalorder %s44, 0
      %p224 = por %p222, %p223
      %s225 = ssub.s32 %s45, %s64
      %p226 = scmp.eq.s32.totalorder %s225, 0
      %s228 = sadd.s32 %s227, 1
      %s229 = scalar_select %p226, %s227, %s228
      %p232 = pneg %p226
      %p233 = scmp.eq.s32.totalorder %s38, 5
      %p234 = por %p232, %p233
      %p235 = scmp.ne.s32.totalorder %s227, %s230
      %p236 = scmp.eq.s32.totalorder %s38, 0
      %p237 = por %p235, %p236
      %p238 = scmp.ne.s32.totalorder %s227, %s230
      %p239 = scmp.eq.s32.totalorder %s43, 5
      %p240 = por %p238, %p239
      %p241 = scmp.ne.s32.totalorder %s230, %s231
      %p242 = scmp.eq.s32.totalorder %s43, 0
      %p243 = por %p241, %p242
      %p244 = scmp.ne.s32.totalorder %s230, %s231
      %p245 = scmp.eq.s32.totalorder %s44, 5
      %p246 = por %p244, %p245
      %p248 = scmp.ne.s32.totalorder %s231, %s247
      %p249 = scmp.eq.s32.totalorder %s44, 0
      %p250 = por %p248, %p249
      %s251 = ssub.s32 %s45, %s64
      %s252 = ssub.s32 %s46, %s60
      %s253 = sor.u32 %s251, %s252
      %s254 = ssub.s32 %s47, %s56
      %s255 = sor.u32 %s253, %s254
      %p256 = scmp.eq.s32.totalorder %s255, 0
      %s258 = sadd.s32 %s257, 1
      %s259 = scalar_select %p256, %s257, %s258
      %p262 = pneg %p256
      %p263 = scmp.eq.s32.totalorder %s38, 5
      %p264 = por %p262, %p263
      %p265 = scmp.ne.s32.totalorder %s257, %s260
      %p266 = scmp.eq.s32.totalorder %s38, 0
      %p267 = por %p265, %p266
      %p268 = scmp.ne.s32.totalorder %s257, %s260
      %p269 = scmp.eq.s32.totalorder %s43, 5
      %p270 = por %p268, %p269
      %p271 = scmp.ne.s32.totalorder %s260, %s261
      %p272 = scmp.eq.s32.totalorder %s43, 0
      %p273 = por %p271, %p272
      %p274 = scmp.ne.s32.totalorder %s260, %s261
      %p275 = scmp.eq.s32.totalorder %s44, 5
      %p276 = por %p274, %p275
      %p278 = scmp.ne.s32.totalorder %s261, %s277
      %p279 = scmp.eq.s32.totalorder %s44, 0
      %p280 = por %p278, %p279
      %s281 = ssub.s32 %s45, %s64
      %s282 = ssub.s32 %s46, %s60
      %s283 = sor.u32 %s281, %s282
      %s284 = ssub.s32 %s47, %s56
      %s285 = sor.u32 %s283, %s284
      %p286 = scmp.eq.s32.totalorder %s285, 0
      %s288 = sadd.s32 %s287, 1
      %s289 = scalar_select %p286, %s287, %s288
      %p292 = pneg %p286
      %p293 = scmp.eq.s32.totalorder %s38, 5
      %p294 = por %p292, %p293
      %p295 = scmp.ne.s32.totalorder %s287, %s290
      %p296 = scmp.eq.s32.totalorder %s38, 0
      %p297 = por %p295, %p296
      %p298 = scmp.ne.s32.totalorder %s287, %s290
      %p299 = scmp.eq.s32.totalorder %s43, 5
      %p300 = por %p298, %p299
      %p301 = scmp.ne.s32.totalorder %s290, %s291
      %p302 = scmp.eq.s32.totalorder %s43, 0
      %p303 = por %p301, %p302
      %p304 = scmp.ne.s32.totalorder %s290, %s291
      %p305 = scmp.eq.s32.totalorder %s44, 5
      %p306 = por %p304, %p305
      %p308 = scmp.ne.s32.totalorder %s291, %s307
      %p309 = scmp.eq.s32.totalorder %s44, 0
      %p310 = por %p308, %p309
      %p311 = scmp.le.s32.totalorder 1, %s38
      %p312 = scmp.lt.s32.totalorder %s38, 7
      %p313 = pnand %p311, %p312
      %p314 = pneg %p313
      // Predicated region
      $region9: #{tpu_custom_call.1} parent=5 // pred_check
        _
      $region10: #{tpu_custom_call.1} parent=5 // pred_check_branch
        %316 = sbr.rel (%p313) target = $region12
      $region11: #{tpu_custom_call.1} parent=5 // pred_region
        %s317 = ssub.s32 %s38, 1
      $region12: #{tpu_custom_call.1} parent=5 // pred_fallthru
        _
      %p318 = scmp.lt.s32.totalorder %s38, 6
      // Predicated region
      $region13: #{tpu_custom_call.1} parent=5 // pred_check
        %p319 = pneg %p318
      $region14: #{tpu_custom_call.1} parent=5 // pred_check_branch
        %321 = sbr.rel (%p319) target = $region16
      $region15: #{tpu_custom_call.1} parent=5 // pred_region
        // Predicated region
        $region17: #{tpu_custom_call.1} parent=15 // pred_check
          %p322 = pneg %p81
        $region18: #{tpu_custom_call.1} parent=15 // pred_check_branch
          %324 = sbr.rel (%p322) target = $region20
        $region19: #{tpu_custom_call.1} parent=15 // pred_region
          %s325 = sand.u32 %s71, 1
          %s326 = scalar_lea.sflag [#allocation6], %s325
          %s327 = sand.u32 %s71, 1
          %s328 = smul.addr %s327, 4
          %s329 = scalar_lea.vmem [#allocation5], %s328
          %s331 = ssub.s32 64, 64
          %332 = vsyncadd %s326, %s331
          %s333 = sadd.s32 %s47, %s46
          %s334 = smul.addr %s45, 2
          %s335 = sadd.s32 %s333, %s334
          %s336 = smul.addr %s335, 64
          %s337 = scalar_lea.hbm %s2, %s336
          %s339 = sshll.u32 %s329, 4
          %s340 = int_to_ptr.vmem [resolvable:$true] %s339
          %342 = dma.hbm_to_vmem [thread:$0]  %s337, 64, %s340, %s326
        $region20: #{tpu_custom_call.1} parent=15 // pred_fallthru
          _
        // Predicated region
        $region21: #{tpu_custom_call.1} parent=15 // pred_check
          %p343 = pneg %p107
        $region22: #{tpu_custom_call.1} parent=15 // pred_check_branch
          %345 = sbr.rel (%p343) target = $region24
        $region23: #{tpu_custom_call.1} parent=15 // pred_region
          %s346 = sand.u32 %s38, 1
          %s347 = scalar_lea.sflag [#allocation9], %s346
          %s348 = sand.u32 %s97, 1
          %s349 = smul.addr %s348, 8
          %s350 = scalar_lea.vmem [#allocation8], %s349
          %s352 = ssub.s32 128, 128
          %353 = vsyncadd %s347, %s352
          %s354 = smul.addr %s45, 2
          %s355 = smul.addr %s354, 64
          %s356 = scalar_lea.hbm %s3, %s355
          %s357 = sshll.u32 %s350, 4
          %s358 = int_to_ptr.vmem [resolvable:$true] %s357
          %363 = dma.hbm_to_vmem [thread:$0]  %s356, 128, %s358, %s347, 64, 64, 4
        $region24: #{tpu_custom_call.1} parent=15 // pred_fallthru
          _
        // Predicated region
        $region25: #{tpu_custom_call.1} parent=15 // pred_check
          %p364 = pneg %p133
        $region26: #{tpu_custom_call.1} parent=15 // pred_check_branch
          %366 = sbr.rel (%p364) target = $region28
        $region27: #{tpu_custom_call.1} parent=15 // pred_region
          %s367 = sand.u32 %s38, 1
          %s368 = scalar_lea.sflag [#allocation9], %s367
          %s369 = sand.u32 %s123, 1
          %s370 = scalar_lea.vmem [#allocation10], %s369
          %s372 = ssub.s32 16, 16
          %373 = vsyncadd %s368, %s372
          %s374 = smul.addr %s45, 16
          %s375 = scalar_lea.hbm %s4, %s374
          %s377 = sshll.u32 %s370, 4
          %s378 = int_to_ptr.vmem [resolvable:$true] %s377
          %380 = dma.hbm_to_vmem [thread:$0]  %s375, 16, %s378, %s368
        $region28: #{tpu_custom_call.1} parent=15 // pred_fallthru
          _
        // Predicated region
        $region29: #{tpu_custom_call.1} parent=15 // pred_check
          %p381 = pneg %p159
        $region30: #{tpu_custom_call.1} parent=15 // pred_check_branch
          %383 = sbr.rel (%p381) target = $region32
        $region31: #{tpu_custom_call.1} parent=15 // pred_region
          %s384 = sand.u32 %s38, 1
          %s385 = scalar_lea.sflag [#allocation12], %s384
          %s386 = sand.u32 %s149, 1
          %s387 = smul.addr %s386, 64
          %s388 = scalar_lea.vmem [#allocation11], %s387
          %s390 = ssub.s32 1024, 1024
          %391 = vsyncadd %s385, %s390
          %s392 = smul.addr %s45, 16
          %s393 = smul.addr %s392, 64
          %s394 = scalar_lea.hbm %s5, %s393
          %s395 = sshll.u32 %s388, 4
          %s396 = int_to_ptr.vmem [resolvable:$true] %s395
          %401 = dma.hbm_to_vmem [thread:$0]  %s394, 1024, %s396, %s385, 128, 128, 8
        $region32: #{tpu_custom_call.1} parent=15 // pred_fallthru
          _
        // Predicated region
        $region33: #{tpu_custom_call.1} parent=15 // pred_check
          %p402 = pneg %p185
        $region34: #{tpu_custom_call.1} parent=15 // pred_check_branch
          %404 = sbr.rel (%p402) target = $region36
        $region35: #{tpu_custom_call.1} parent=15 // pred_region
          %p405 = scmp.lt.s32.totalorder %s45, 2
          %s406 = scalar_select %p405, %s45, 2
          %s407 = smul.addr %s406, 2
          %s408 = scalar_lea.vmem %s6, %s407
        $region36: #{tpu_custom_call.1} parent=15 // pred_fallthru
          _
        // Predicated region
        $region37: #{tpu_custom_call.1} parent=15 // pred_check
          %p409 = pneg %p211
        $region38: #{tpu_custom_call.1} parent=15 // pred_check_branch
          %411 = sbr.rel (%p409) target = $region40
        $region39: #{tpu_custom_call.1} parent=15 // pred_region
          %s412 = sand.u32 %s38, 1
          %s413 = scalar_lea.sflag [#allocation12], %s412
          %s414 = sand.u32 %s201, 1
          %s415 = smul.addr %s414, 64
          %s416 = scalar_lea.vmem [#allocation13], %s415
          %s418 = ssub.s32 1024, 1024
          %419 = vsyncadd %s413, %s418
          %s420 = smul.addr %s45, 16
          %s421 = smul.addr %s420, 64
          %s422 = scalar_lea.hbm %s7, %s421
          %s423 = sshll.u32 %s416, 4
          %s424 = int_to_ptr.vmem [resolvable:$true] %s423
          %429 = dma.hbm_to_vmem [thread:$0]  %s422, 1024, %s424, %s413, 128, 128, 8
        $region40: #{tpu_custom_call.1} parent=15 // pred_fallthru
          _
        // Predicated region
        $region41: #{tpu_custom_call.1} parent=15 // pred_check
          %p430 = pneg %p237
        $region42: #{tpu_custom_call.1} parent=15 // pred_check_branch
          %432 = sbr.rel (%p430) target = $region44
        $region43: #{tpu_custom_call.1} parent=15 // pred_region
          %p433 = scmp.lt.s32.totalorder %s45, 2
          %s434 = scalar_select %p433, %s45, 2
          %s435 = smul.addr %s434, 2
          %s436 = scalar_lea.vmem %s8, %s435
        $region44: #{tpu_custom_call.1} parent=15 // pred_fallthru
          _
      $region16: #{tpu_custom_call.1} parent=5 // pred_fallthru
        _
      %p437 = scmp.le.s32.totalorder 1, %s38
      %p438 = scmp.lt.s32.totalorder %s38, 7
      %p439 = pnand %p437, %p438
      %p440 = pneg %p439
      // Predicated region
      $region45: #{tpu_custom_call.1} parent=5 // pred_check
        _
      $region46: #{tpu_custom_call.1} parent=5 // pred_check_branch
        %442 = sbr.rel (%p439) target = $region48
      $region47: #{tpu_custom_call.1} parent=5 // pred_region
        %s443 = ssub.s32 %s38, 1
        %s444 = sand.u32 %s74, 1
        %s445 = scalar_lea.sflag [#allocation6], %s444
        %s446 = sand.u32 %s74, 1
        %s447 = smul.addr %s446, 4
        %s448 = scalar_lea.vmem [#allocation5], %s447
        // Predicated region
        $region49: #{tpu_custom_call.1} parent=47 // pred_check
          %p449 = pneg %p87
        $region50: #{tpu_custom_call.1} parent=47 // pred_check_branch
          %451 = sbr.rel (%p449) target = $region52
        $region51: #{tpu_custom_call.1} parent=47 // pred_region
          %452 = dma.done %s445, 64
        $region52: #{tpu_custom_call.1} parent=47 // pred_fallthru
          _
        %s453 = sand.u32 %s43, 1
        %s454 = scalar_lea.sflag [#allocation9], %s453
        %s455 = sand.u32 %s100, 1
        %s456 = smul.addr %s455, 8
        %s457 = scalar_lea.vmem [#allocation8], %s456
        // Predicated region
        $region53: #{tpu_custom_call.1} parent=47 // pred_check
          %p458 = pneg %p113
        $region54: #{tpu_custom_call.1} parent=47 // pred_check_branch
          %460 = sbr.rel (%p458) target = $region56
        $region55: #{tpu_custom_call.1} parent=47 // pred_region
          %461 = dma.done %s454, 128
        $region56: #{tpu_custom_call.1} parent=47 // pred_fallthru
          _
        %s462 = sand.u32 %s43, 1
        %s463 = scalar_lea.sflag [#allocation9], %s462
        %s464 = sand.u32 %s126, 1
        %s465 = scalar_lea.vmem [#allocation10], %s464
        // Predicated region
        $region57: #{tpu_custom_call.1} parent=47 // pred_check
          %p466 = pneg %p139
        $region58: #{tpu_custom_call.1} parent=47 // pred_check_branch
          %468 = sbr.rel (%p466) target = $region60
        $region59: #{tpu_custom_call.1} parent=47 // pred_region
          %469 = dma.done %s463, 16
        $region60: #{tpu_custom_call.1} parent=47 // pred_fallthru
          _
        %s470 = sand.u32 %s43, 1
        %s471 = scalar_lea.sflag [#allocation12], %s470
        %s472 = sand.u32 %s152, 1
        %s473 = smul.addr %s472, 64
        %s474 = scalar_lea.vmem [#allocation11], %s473
        // Predicated region
        $region61: #{tpu_custom_call.1} parent=47 // pred_check
          %p475 = pneg %p165
        $region62: #{tpu_custom_call.1} parent=47 // pred_check_branch
          %477 = sbr.rel (%p475) target = $region64
        $region63: #{tpu_custom_call.1} parent=47 // pred_region
          %478 = dma.done %s471, 1024
        $region64: #{tpu_custom_call.1} parent=47 // pred_fallthru
          _
        %s479 = sand.u32 %s43, 1
        %s480 = scalar_lea.sflag [#allocation12], %s479
        %s481 = sand.u32 %s204, 1
        %s482 = smul.addr %s481, 64
        %s483 = scalar_lea.vmem [#allocation13], %s482
        // Predicated region
        $region65: #{tpu_custom_call.1} parent=47 // pred_check
          %p484 = pneg %p217
        $region66: #{tpu_custom_call.1} parent=47 // pred_check_branch
          %486 = sbr.rel (%p484) target = $region68
        $region67: #{tpu_custom_call.1} parent=47 // pred_region
          %487 = dma.done %s480, 1024
        $region68: #{tpu_custom_call.1} parent=47 // pred_fallthru
          _
        %s488 = sand.u32 %s74, 1
        %s489 = scalar_lea.sflag [#allocation6], %s488
        %s490 = sand.u32 %s74, 1
        %s491 = smul.addr %s490, 4
        %s492 = scalar_lea.vmem [#allocation5], %s491
        %p493 = pneg %p87
        %p494 = pneg %p84
        %s495 = sand.u32 %s43, 1
        %s496 = scalar_lea.sflag [#allocation9], %s495
        %s497 = sand.u32 %s100, 1
        %s498 = smul.addr %s497, 8
        %s499 = scalar_lea.vmem [#allocation8], %s498
        %p500 = pneg %p113
        %p501 = pneg %p110
        %s502 = sand.u32 %s43, 1
        %s503 = scalar_lea.sflag [#allocation9], %s502
        %s504 = sand.u32 %s126, 1
        %s505 = scalar_lea.vmem [#allocation10], %s504
        %p506 = pneg %p139
        %p507 = pneg %p136
        %s508 = sand.u32 %s43, 1
        %s509 = scalar_lea.sflag [#allocation12], %s508
        %s510 = sand.u32 %s152, 1
        %s511 = smul.addr %s510, 64
        %s512 = scalar_lea.vmem [#allocation11], %s511
        %p513 = pneg %p165
        %p514 = pneg %p162
        %p515 = scmp.lt.s32.totalorder %s48, 2
        %s516 = scalar_select %p515, %s48, 2
        %s517 = smul.addr %s516, 2
        %s518 = scalar_lea.vmem %s6, %s517
        %p519 = pneg %p191
        %p520 = pneg %p188
        %s521 = sand.u32 %s43, 1
        %s522 = scalar_lea.sflag [#allocation12], %s521
        %s523 = sand.u32 %s204, 1
        %s524 = smul.addr %s523, 64
        %s525 = scalar_lea.vmem [#allocation13], %s524
        %p526 = pneg %p217
        %p527 = pneg %p214
        %p528 = scmp.lt.s32.totalorder %s48, 2
        %s529 = scalar_select %p528, %s48, 2
        %s530 = smul.addr %s529, 2
        %s531 = scalar_lea.vmem %s8, %s530
        %p532 = pneg %p243
        %p533 = pneg %p240
        %p534 = pneg %p273
        %p535 = pneg %p270
        %s536 = sand.u32 %s260, 1
        %s537 = scalar_lea.sflag [#allocation7], %s536
        %s538 = sand.u32 %s260, 1
        %s539 = smul.addr %s538, 4
        %s540 = scalar_lea.vmem [#allocation14], %s539
        %p541 = pneg %p303
        %p542 = pneg %p300
        %s543 = sand.u32 %s290, 1
        %s544 = scalar_lea.sflag [#allocation16], %s543
        %s545 = sand.u32 %s290, 1
        %s546 = smul.addr %s545, 4
        %s547 = scalar_lea.vmem [#allocation15], %s546
        %p548 = scmp.lt.s32.totalorder %s48, 2
        %s549 = scalar_select %p548, %s48, 2
        %s550 = smul.addr %s549, 2
        %s551 = scalar_lea.vmem %s6, %s550
        %p552 = scmp.lt.s32.totalorder %s48, 2
        %s553 = scalar_select %p552, %s48, 2
        %s554 = smul.addr %s553, 2
        %s555 = scalar_lea.vmem %s8, %s554
        %s557 = smul.u32 %s48, 2
        %s558 = sadd.s32 %s557, %s49
        %s559 = sld [smem:[#allocation3 + %s558]]
        %s560 = sld [smem:[#allocation4 + %s558]]
        %v561 = vld [vmem:[%s448] sm:$0xf]
        %v562 = vunpack.c.l.bf16 %v561
        %v563 = vstv %s559
        %v564 = vsub.f32 %v562, %v563
        %v565 = vstv %s560
        %v566 = vmul.f32 %v564, %v565
        %v567 = vpack.c.bf16 %v566, %v566
        %v568 = vld [vmem:[%s457] sm:$0xf]
        %v569 = vld [vmem:[%s457 + $0x4] sm:$0xf]
        %v570 = vld [vmem:[%s465] sm:$0x1]
        %v572 = vlaneseq
        %v573 = vshrl.u32 %v572, 7
        %v574 = vsub.s32 0, %v573
        %v575 = vrot.slane %v570, %v574
        %v579 = vunpack.c.l.b16 %v568
        %v580 = vunpack.c.l.b16 %v569
        %v581 = vpack.c.b16 %v580, %v579
        %vm583 = vcmask 130048
        %v585 = vsel %vm583, %v567, 0
        %587 = vmatprep.subr.bf16.mxu0 0
        %588 = vmatpush1.bf16.msra.mxu0 0
        %589 = vmatprep.subr.bf16.mxu0 0
        %590 = vmatpush1.bf16.msra.mxu0 0
        %591 = vmatprep.subr.bf16.mxu0 0
        %592 = vmatpush1.bf16.msra.mxu0 0
        %593 = vmatprep.subr.bf16.mxu0 0
        %594 = vmatpush1.bf16.msra.mxu0 0
        %595 = vmatprep.subr.bf16.mxu0 0
        %596 = vmatpush1.bf16.msra.mxu0 0
        %597 = vmatprep.subr.bf16.mxu0 0
        %598 = vmatpush1.bf16.msra.mxu0 0
        %599 = vmatprep.subr.bf16.mxu0 0
        %600 = vmatpush1.bf16.msra.mxu0 0
        %601 = vmatprep.subr.bf16.mxu0 0
        %602 = vmatpush1.bf16.msra.mxu0 %v581
        %603 = vmatprep.subr.bf16.mxu0 0
        %604 = vmatpush2.bf16.msra.mxu0 0
        %605 = vmatprep.subr.bf16.mxu0 0
        %606 = vmatpush2.bf16.msra.mxu0 0
        %607 = vmatprep.subr.bf16.mxu0 0
        %608 = vmatpush2.bf16.msra.mxu0 0
        %609 = vmatprep.subr.bf16.mxu0 0
        %610 = vmatpush2.bf16.msra.mxu0 0
        %611 = vmatprep.subr.bf16.mxu0 0
        %612 = vmatpush2.bf16.msra.mxu0 0
        %613 = vmatprep.subr.bf16.mxu0 0
        %614 = vmatpush2.bf16.msra.mxu0 0
        %615 = vmatprep.subr.bf16.mxu0 0
        %616 = vmatpush2.bf16.msra.mxu0 0
        %617 = vmatprep.subr.bf16.mxu0 0
        %618 = vmatpush2.bf16.msra.mxu0 0
        %619 = vmatprep.mubr.bf16.mxu0 0
        %620 = vmatmul.mubr.bf16.gmra.mxu0 %v585
        %v621 = vpop.f32.mrf.mxu0
        %v622 = vadd.f32 %v575, %v621
        %v623 = vpop.f32.mrf.mxu0
        %v624 = vpop.f32.mrf.mxu0
        %v625 = vpop.f32.mrf.mxu0
        %626 = vdwg.mxu0
        %v627 = vpack.c.bf16 %v622, %v622
        %v628 = vtanh.bf16.pop %v627
        %v629 = vld [vmem:[%s474] sm:$0xff]
        %v630 = vld [vmem:[%s474 + $0x8] sm:$0xff]
        %v631 = vld [vmem:[%s474 + $0x10] sm:$0xff]
        %v632 = vld [vmem:[%s474 + $0x18] sm:$0xff]
        %v633 = vld [vmem:[%s474 + $0x20] sm:$0xff]
        %v634 = vld [vmem:[%s474 + $0x28] sm:$0xff]
        %v635 = vld [vmem:[%s474 + $0x30] sm:$0xff]
        %v636 = vld [vmem:[%s474 + $0x38] sm:$0xff]
        %v637 = vld [vmem:[%s551] sm:$0x3]
        %v639 = vlaneseq
        %v640 = vshrl.u32 %v639, 7
        %v641 = vsub.s32 0, %v640
        %v642 = vrot.slane %v637, %v641
        %v643 = vlaneseq
        %v644 = vshrl.u32 %v643, 7
        %v645 = vsub.s32 1, %v644
        %v646 = vrot.slane %v637, %v645
        %v657 = vunpack.c.l.b16 %v629
        %v658 = vunpack.c.h.b16 %v629
        %v659 = vunpack.c.l.b16 %v630
        %v660 = vunpack.c.h.b16 %v630
        %v661 = vunpack.c.l.b16 %v631
        %v662 = vunpack.c.h.b16 %v631
        %v663 = vunpack.c.l.b16 %v632
        %v664 = vunpack.c.h.b16 %v632
        %v665 = vunpack.c.l.b16 %v633
        %v666 = vunpack.c.h.b16 %v633
        %v667 = vunpack.c.l.b16 %v634
        %v668 = vunpack.c.h.b16 %v634
        %v669 = vunpack.c.l.b16 %v635
        %v670 = vunpack.c.h.b16 %v635
        %v671 = vunpack.c.l.b16 %v636
        %v672 = vunpack.c.h.b16 %v636
        %v673 = vpack.c.b16 %v659, %v657
        %v674 = vpack.c.b16 %v660, %v658
        %v675 = vpack.c.b16 %v663, %v661
        %v676 = vpack.c.b16 %v664, %v662
        %v677 = vpack.c.b16 %v667, %v665
        %v678 = vpack.c.b16 %v668, %v666
        %v679 = vpack.c.b16 %v671, %v669
        %v680 = vpack.c.b16 %v672, %v670
        %vm689 = vcmask 523264
        %v691 = vsel %vm689, %v628, 0
        %693 = vmatprep.subr.bf16.mxu0 0
        %694 = vmatpush1.bf16.msra.mxu0 0
        %695 = vmatprep.subr.bf16.mxu0 0
        %696 = vmatpush1.bf16.msra.mxu0 0
        %697 = vmatprep.subr.bf16.mxu0 0
        %698 = vmatpush1.bf16.msra.mxu0 0
        %699 = vmatprep.subr.bf16.mxu0 0
        %700 = vmatpush1.bf16.msra.mxu0 0
        %701 = vmatprep.subr.bf16.mxu0 %v680
        %702 = vmatpush1.bf16.msra.mxu0 %v679
        %703 = vmatprep.subr.bf16.mxu0 %v678
        %704 = vmatpush1.bf16.msra.mxu0 %v677
        %705 = vmatprep.subr.bf16.mxu0 %v676
        %706 = vmatpush1.bf16.msra.mxu0 %v675
        %707 = vmatprep.subr.bf16.mxu0 %v674
        %708 = vmatpush1.bf16.msra.mxu0 %v673
        %709 = vmatprep.subr.bf16.mxu0 0
        %710 = vmatpush2.bf16.msra.mxu0 0
        %711 = vmatprep.subr.bf16.mxu0 0
        %712 = vmatpush2.bf16.msra.mxu0 0
        %713 = vmatprep.subr.bf16.mxu0 0
        %714 = vmatpush2.bf16.msra.mxu0 0
        %715 = vmatprep.subr.bf16.mxu0 0
        %716 = vmatpush2.bf16.msra.mxu0 0
        %717 = vmatprep.subr.bf16.mxu0 0
        %718 = vmatpush2.bf16.msra.mxu0 0
        %719 = vmatprep.subr.bf16.mxu0 0
        %720 = vmatpush2.bf16.msra.mxu0 0
        %721 = vmatprep.subr.bf16.mxu0 0
        %722 = vmatpush2.bf16.msra.mxu0 0
        %723 = vmatprep.subr.bf16.mxu0 0
        %724 = vmatpush2.bf16.msra.mxu0 0
        %725 = vmatprep.mubr.bf16.mxu0 0
        %726 = vmatmul.mubr.bf16.gmra.mxu0 %v691
        %v727 = vpop.f32.mrf.mxu0
        %v728 = vadd.f32 %v642, %v727
        %v729 = vpop.f32.mrf.mxu0
        %v730 = vadd.f32 %v646, %v729
        %v731 = vpop.f32.mrf.mxu0
        %v732 = vpop.f32.mrf.mxu0
        %733 = vdwg.mxu0
        %v734 = vld [vmem:[%s483] sm:$0xff]
        %v735 = vld [vmem:[%s483 + $0x8] sm:$0xff]
        %v736 = vld [vmem:[%s483 + $0x10] sm:$0xff]
        %v737 = vld [vmem:[%s483 + $0x18] sm:$0xff]
        %v738 = vld [vmem:[%s483 + $0x20] sm:$0xff]
        %v739 = vld [vmem:[%s483 + $0x28] sm:$0xff]
        %v740 = vld [vmem:[%s483 + $0x30] sm:$0xff]
        %v741 = vld [vmem:[%s483 + $0x38] sm:$0xff]
        %v742 = vld [vmem:[%s555] sm:$0x3]
        %v744 = vlaneseq
        %v745 = vshrl.u32 %v744, 7
        %v746 = vsub.s32 0, %v745
        %v747 = vrot.slane %v742, %v746
        %v748 = vlaneseq
        %v749 = vshrl.u32 %v748, 7
        %v750 = vsub.s32 1, %v749
        %v751 = vrot.slane %v742, %v750
        %755 = vrot.lane.b32.xlu0 %v628, 64
        %v756 = vpop.permute.xlu0 %755
        %v765 = vunpack.c.l.b16 %v734
        %v766 = vunpack.c.h.b16 %v734
        %v767 = vunpack.c.l.b16 %v735
        %v768 = vunpack.c.h.b16 %v735
        %v769 = vunpack.c.l.b16 %v736
        %v770 = vunpack.c.h.b16 %v736
        %v771 = vunpack.c.l.b16 %v737
        %v772 = vunpack.c.h.b16 %v737
        %v773 = vunpack.c.l.b16 %v738
        %v774 = vunpack.c.h.b16 %v738
        %v775 = vunpack.c.l.b16 %v739
        %v776 = vunpack.c.h.b16 %v739
        %v777 = vunpack.c.l.b16 %v740
        %v778 = vunpack.c.h.b16 %v740
        %v779 = vunpack.c.l.b16 %v741
        %v780 = vunpack.c.h.b16 %v741
        %v781 = vpack.c.b16 %v767, %v765
        %v782 = vpack.c.b16 %v768, %v766
        %v783 = vpack.c.b16 %v771, %v769
        %v784 = vpack.c.b16 %v772, %v770
        %v785 = vpack.c.b16 %v775, %v773
        %v786 = vpack.c.b16 %v776, %v774
        %v787 = vpack.c.b16 %v779, %v777
        %v788 = vpack.c.b16 %v780, %v778
        %v798 = vsel %vm689, %v756, 0
        %800 = vmatprep.subr.bf16.mxu0 0
        %801 = vmatpush1.bf16.msra.mxu0 0
        %802 = vmatprep.subr.bf16.mxu0 0
        %803 = vmatpush1.bf16.msra.mxu0 0
        %804 = vmatprep.subr.bf16.mxu0 0
        %805 = vmatpush1.bf16.msra.mxu0 0
        %806 = vmatprep.subr.bf16.mxu0 0
        %807 = vmatpush1.bf16.msra.mxu0 0
        %808 = vmatprep.subr.bf16.mxu0 %v788
        %809 = vmatpush1.bf16.msra.mxu0 %v787
        %810 = vmatprep.subr.bf16.mxu0 %v786
        %811 = vmatpush1.bf16.msra.mxu0 %v785
        %812 = vmatprep.subr.bf16.mxu0 %v784
        %813 = vmatpush1.bf16.msra.mxu0 %v783
        %814 = vmatprep.subr.bf16.mxu0 %v782
        %815 = vmatpush1.bf16.msra.mxu0 %v781
        %816 = vmatprep.subr.bf16.mxu0 0
        %817 = vmatpush2.bf16.msra.mxu0 0
        %818 = vmatprep.subr.bf16.mxu0 0
        %819 = vmatpush2.bf16.msra.mxu0 0
        %820 = vmatprep.subr.bf16.mxu0 0
        %821 = vmatpush2.bf16.msra.mxu0 0
        %822 = vmatprep.subr.bf16.mxu0 0
        %823 = vmatpush2.bf16.msra.mxu0 0
        %824 = vmatprep.subr.bf16.mxu0 0
        %825 = vmatpush2.bf16.msra.mxu0 0
        %826 = vmatprep.subr.bf16.mxu0 0
        %827 = vmatpush2.bf16.msra.mxu0 0
        %828 = vmatprep.subr.bf16.mxu0 0
        %829 = vmatpush2.bf16.msra.mxu0 0
        %830 = vmatprep.subr.bf16.mxu0 0
        %831 = vmatpush2.bf16.msra.mxu0 0
        %832 = vmatprep.mubr.bf16.mxu0 0
        %833 = vmatmul.mubr.bf16.gmra.mxu0 %v798
        %v834 = vpop.f32.mrf.mxu0
        %v835 = vadd.f32 %v747, %v834
        %v836 = vpop.f32.mrf.mxu0
        %v837 = vadd.f32 %v751, %v836
        %v838 = vpop.f32.mrf.mxu0
        %v839 = vpop.f32.mrf.mxu0
        %840 = vdwg.mxu0
        %v841 = vxor.u32 %v730, 2147483648
        %v842 = vmul.f32 %v841, 1.442695
        %v843 = vpow.pop %v842
        %v844 = vadd.f32 %v843, 1.0
        %v845 = vrcp.pop %v844
        %v846 = vmul.f32 1.0, %v845
        %v847 = vmul.f32 %v728, %v846
        %v848 = vpack.c.bf16 %v847, %v847
        %849 = vst [vmem:[%s540] sm:$0xf] %v848
        %v850 = vxor.u32 %v837, 2147483648
        %v851 = vmul.f32 %v850, 1.442695
        %v852 = vpow.pop %v851
        %v853 = vadd.f32 %v852, 1.0
        %v854 = vrcp.pop %v853
        %v855 = vmul.f32 1.0, %v854
        %v856 = vmul.f32 %v835, %v855
        %v857 = vpack.c.bf16 %v856, %v856
        %858 = vst [vmem:[%s547] sm:$0xf] %v857
        %s859 = sand.u32 %s260, 1
        %s860 = scalar_lea.sflag [#allocation7], %s859
        %s861 = sand.u32 %s260, 1
        %s862 = smul.addr %s861, 4
        %s863 = scalar_lea.vmem [#allocation14], %s862
        %s864 = sand.u32 %s290, 1
        %s865 = scalar_lea.sflag [#allocation16], %s864
        %s866 = sand.u32 %s290, 1
        %s867 = smul.addr %s866, 4
        %s868 = scalar_lea.vmem [#allocation15], %s867
        // Predicated region
        $region69: #{tpu_custom_call.1} parent=47 // pred_check
          %p869 = pneg %p270
        $region70: #{tpu_custom_call.1} parent=47 // pred_check_branch
          %871 = sbr.rel (%p869) target = $region72
        $region71: #{tpu_custom_call.1} parent=47 // pred_region
          %s873 = ssub.s32 64, 64
          %874 = vsyncadd %s860, %s873
          %s875 = sadd.s32 %s50, %s49
          %s876 = smul.addr %s48, 2
          %s877 = sadd.s32 %s875, %s876
          %s878 = smul.addr %s877, 64
          %s879 = scalar_lea.hbm %s9, %s878
          %s881 = sshll.u32 %s863, 4
          %s882 = int_to_ptr.vmem [resolvable:$true] %s881
          %884 = dma.vmem_to_hbm [thread:$0]  %s882, 64, %s879, %s860
        $region72: #{tpu_custom_call.1} parent=47 // pred_fallthru
          _
        // Predicated region
        $region73: #{tpu_custom_call.1} parent=47 // pred_check
          %p885 = pneg %p300
        $region74: #{tpu_custom_call.1} parent=47 // pred_check_branch
          %887 = sbr.rel (%p885) target = $region76
        $region75: #{tpu_custom_call.1} parent=47 // pred_region
          %s889 = ssub.s32 64, 64
          %890 = vsyncadd %s865, %s889
          %s891 = sadd.s32 %s50, %s49
          %s892 = smul.addr %s48, 2
          %s893 = sadd.s32 %s891, %s892
          %s894 = smul.addr %s893, 64
          %s895 = scalar_lea.hbm %s10, %s894
          %s897 = sshll.u32 %s868, 4
          %s898 = int_to_ptr.vmem [resolvable:$true] %s897
          %900 = dma.vmem_to_hbm [thread:$0]  %s898, 64, %s895, %s865
        $region76: #{tpu_custom_call.1} parent=47 // pred_fallthru
          _
      $region48: #{tpu_custom_call.1} parent=5 // pred_fallthru
        _
      %p901 = scmp.le.s32.totalorder 2, %s38
      // Predicated region
      $region77: #{tpu_custom_call.1} parent=5 // pred_check
        %p902 = pneg %p901
      $region78: #{tpu_custom_call.1} parent=5 // pred_check_branch
        %904 = sbr.rel (%p902) target = $region80
      $region79: #{tpu_custom_call.1} parent=5 // pred_region
        %s905 = ssub.s32 %s38, 2
        // Predicated region
        $region81: #{tpu_custom_call.1} parent=79 // pred_check
          %p906 = pneg %p276
        $region82: #{tpu_custom_call.1} parent=79 // pred_check_branch
          %908 = sbr.rel (%p906) target = $region84
        $region83: #{tpu_custom_call.1} parent=79 // pred_region
          %s909 = sand.u32 %s261, 1
          %s910 = scalar_lea.sflag [#allocation7], %s909
          %s911 = sand.u32 %s261, 1
          %s912 = smul.addr %s911, 4
          %s913 = scalar_lea.vmem [#allocation14], %s912
          %914 = dma.done %s910, 64
        $region84: #{tpu_custom_call.1} parent=79 // pred_fallthru
          _
        // Predicated region
        $region85: #{tpu_custom_call.1} parent=79 // pred_check
          %p915 = pneg %p306
        $region86: #{tpu_custom_call.1} parent=79 // pred_check_branch
          %917 = sbr.rel (%p915) target = $region88
        $region87: #{tpu_custom_call.1} parent=79 // pred_region
          %s918 = sand.u32 %s291, 1
          %s919 = scalar_lea.sflag [#allocation16], %s918
          %s920 = sand.u32 %s291, 1
          %s921 = smul.addr %s920, 4
          %s922 = scalar_lea.vmem [#allocation15], %s921
          %923 = dma.done %s919, 64
        $region88: #{tpu_custom_call.1} parent=79 // pred_fallthru
          _
      $region80: #{tpu_custom_call.1} parent=5 // pred_fallthru
        _
    $region6: #{tpu_custom_call.1} parent=1 // loop_footer
      %s42 = sadd.s32 1, %s38
    $region7: #{tpu_custom_call.1} parent=1 // loop_footer_branch
      %37 = sbr.rel target = $region3
    $region8: #{tpu_custom_call.1} parent=1 // loop_exit
      _
    %924 = vsyncpa [#allocation6], 1
    %s925 = scalar_lea.sflag [#allocation6], 1
    %926 = vsyncpa %s925, 1
    %927 = vsyncpa [#allocation9], 1
    %s928 = scalar_lea.sflag [#allocation9], 1
    %929 = vsyncpa %s928, 1
    %930 = vsyncpa [#allocation12], 1
    %s931 = scalar_lea.sflag [#allocation12], 1
    %932 = vsyncpa %s931, 1
    %933 = vsyncpa [#allocation7], 1
    %s934 = scalar_lea.sflag [#allocation7], 1
    %935 = vsyncpa %s934, 1
    %936 = vsyncpa [#allocation16], 1
    %s937 = scalar_lea.sflag [#allocation16], 1
    %938 = vsyncpa %s937, 1

</llo_original>
